<compile_context>
chip_gen: v7x
topology: tpu7x:2x2x1
jax: 0.10.0
libtpu: 0.0.40
codegen_flags: <defaults>
</compile_context>

<pallas_src>
import jax
import jax.numpy as jnp
from jax import lax
from jax.experimental import pallas as pl
from jax.experimental.pallas import tpu as pltpu


def _cdiv(a, b):
    return -(-a // b)


def _round_up(x, m):
    return ((x + m - 1) // m) * m


def _pick_tile(dim, tmax, mult):
    """Largest tile <= tmax that is a multiple of `mult` and minimizes padding of `dim`."""
    dim_r = _round_up(dim, mult)
    if dim_r <= tmax:
        return dim_r
    n_tiles = _cdiv(dim_r, tmax)
    return _round_up(_cdiv(dim, n_tiles), mult)


def _default_vmem_limit_bytes():
    # 3/4 of physical VMEM, clamped to [32 MiB, 96 MiB]:
    #   v5e/v6e (128 MiB physical) -> 96 MiB; v7x (64 MiB per TC) -> 48 MiB.
    limit = 48 * 1024 * 1024
    try:
        phys = pltpu.get_tpu_info().vmem_capacity_bytes
        limit = max(32 * 1024 * 1024, min(96 * 1024 * 1024, (3 * phys) // 4))
    except Exception:
        pass
    return limit


def _linear_kernel_single_k(x_ref, w_ref, b_ref, o_ref):
    # x_ref: (tm, K), w_ref: (tn, K) in PyTorch [C_out, C_in] layout.
    # Contract last dims -> x @ w.T without any transpose in HBM or VMEM.
    acc = lax.dot_general(
        x_ref[...], w_ref[...],
        dimension_numbers=(((1,), (1,)), ((), ())),
        preferred_element_type=jnp.float32,
    )
    o_ref[...] = (acc + b_ref[...]).astype(o_ref.dtype)


def _linear_kernel_tiled_k(x_ref, w_ref, b_ref, o_ref, acc_ref):
    k = pl.program_id(2)

    @pl.when(k == 0)
    def _():
        acc_ref[...] = jnp.zeros_like(acc_ref)

    acc_ref[...] += lax.dot_general(
        x_ref[...], w_ref[...],
        dimension_numbers=(((1,), (1,)), ((), ())),
        preferred_element_type=jnp.float32,
    )

    # Bias add + cast + store only once per output tile (last K step).
    @pl.when(k == pl.num_programs(2) - 1)
    def _():
        o_ref[...] = (acc_ref[...] + b_ref[...]).astype(o_ref.dtype)


def linear_pallas(x, weight, bias, *, tm_max=512, tn_max=1024, tk_max=512,
                  compute_dtype=None, vmem_limit_bytes=None):
    """y = x @ weight.T + bias, matching torch.nn.Linear.

    x:      [B, C_in]
    weight: [C_out, C_in]   (PyTorch convention, used as-is — no transpose)
    bias:   [C_out]
    compute_dtype: None (keep x.dtype, exact semantics) or e.g. jnp.bfloat16
                   (bf16 x/W tiles, f32 accumulation/bias/output).
    """
    B, C_in = x.shape
    C_out, C_in_w = weight.shape
    assert C_in_w == C_in, "weight must be [C_out, C_in]"

    out_dtype = x.dtype
    cdt = jnp.dtype(compute_dtype) if compute_dtype is not None else jnp.dtype(x.dtype)
    # Sublane packing: f32 -> 8 rows/vreg, bf16 -> 16, 8-bit -> 32.
    sub_mult = max(8, 32 // cdt.itemsize)

    # Padding-aware, lane-dense tile selection.
    tm = _pick_tile(B, tm_max, sub_mult)
    tn = _pick_tile(C_out, tn_max, 128)
    tk = _pick_tile(C_in, tk_max, 128)

    Mp, Np, Kp = _round_up(B, tm), _round_up(C_out, tn), _round_up(C_in, tk)
    mt, nt, kt = Mp // tm, Np // tn, Kp // tk

    # Guarantee >=2 iterations on a "parallel" axis so v7x's second TensorCore
    # gets work (prefer splitting M: sublane dim, no extra lane padding).
    if mt == 1 and nt == 1:
        if Mp >= 2 * sub_mult:
            tm = _round_up(_cdiv(Mp, 2), sub_mult)
            Mp = _round_up(B, tm)
            mt = Mp // tm
        elif Np >= 256:
            tn = _round_up(_cdiv(Np, 2), 128)
            Np = _round_up(C_out, tn)
            nt = Np // tn

    # Cast (optional) + zero-pad once in the wrapper: padded K contributes zero
    # to the dot; padded M/N rows/cols are sliced off at the end.
    xc = x.astype(cdt)
    wc = weight.astype(cdt)
    bf = bias.astype(jnp.float32).reshape(1, C_out)
    if Mp != B or Kp != C_in:
        xc = jnp.pad(xc, ((0, Mp - B), (0, Kp - C_in)))
    if Np != C_out or Kp != C_in:
        wc = jnp.pad(wc, ((0, Np - C_out), (0, Kp - C_in)))
    if Np != C_out:
        bf = jnp.pad(bf, ((0, 0), (0, Np - C_out)))

    cost = pl.CostEstimate(
        flops=2 * Mp * Np * Kp,
        bytes_accessed=(xc.dtype.itemsize * Mp * Kp * nt
                        + wc.dtype.itemsize * Np * Kp * mt
                        + jnp.dtype(out_dtype).itemsize * Mp * Np
                        + 4 * Np),
        transcendentals=0,
    )
    if vmem_limit_bytes is None:
        vmem_limit_bytes = _default_vmem_limit_bytes()
    cparams_kwargs = dict(vmem_limit_bytes=vmem_limit_bytes)

    if kt == 1:
        # Whole K fits per tile: no accumulator scratch, no output revisit,
        # both grid axes parallel (megacore sharding on v7x).
        out = pl.pallas_call(
            _linear_kernel_single_k,
            out_shape=jax.ShapeDtypeStruct((Mp, Np), out_dtype),
            grid_spec=pltpu.PrefetchScalarGridSpec(
                num_scalar_prefetch=0,
                grid=(mt, nt),
                in_specs=[
                    pl.BlockSpec((tm, Kp), lambda i, j: (i, 0)),
                    pl.BlockSpec((tn, Kp), lambda i, j: (j, 0)),
                    pl.BlockSpec((1, tn), lambda i, j: (0, j)),
                ],
                out_specs=pl.BlockSpec((tm, tn), lambda i, j: (i, j)),
            ),
            compiler_params=pltpu.CompilerParams(
                dimension_semantics=("parallel", "parallel"), **cparams_kwargs),
            cost_estimate=cost,
        )(xc, wc, bf)
    else:
        # K-tiled path: f32 VMEM accumulator, K as the last ("arbitrary") grid axis.
        out = pl.pallas_call(
            _linear_kernel_tiled_k,
            out_shape=jax.ShapeDtypeStruct((Mp, Np), out_dtype),
            grid_spec=pltpu.PrefetchScalarGridSpec(
                num_scalar_prefetch=0,
                grid=(mt, nt, kt),
                in_specs=[
                    pl.BlockSpec((tm, tk), lambda i, j, k: (i, k)),
                    pl.BlockSpec((tn, tk), lambda i, j, k: (j, k)),
                    pl.BlockSpec((1, tn), lambda i, j, k: (0, j)),
                ],
                out_specs=pl.BlockSpec((tm, tn), lambda i, j, k: (i, j)),
                scratch_shapes=[pltpu.VMEM((tm, tn), jnp.float32)],
            ),
            compiler_params=pltpu.CompilerParams(
                dimension_semantics=("parallel", "parallel", "arbitrary"),
                **cparams_kwargs),
            cost_estimate=cost,
        )(xc, wc, bf)

    if Mp != B or Np != C_out:
        out = out[:B, :C_out]
    return out


if __name__ == "__main__":
    key = jax.random.PRNGKey(0)

    # --- Case 1: small shapes consistent with LinearLayer(c_in=32, c_out=64), f32 ---
    B, C_IN, C_OUT = 8, 32, 64
    k1, k2, k3, key = jax.random.split(key, 4)
    bound = 1.0 / (C_IN ** 0.5)
    weight = jax.random.uniform(k2, (C_OUT, C_IN), jnp.float32, -bound, bound)
    bias = jax.random.uniform(k3, (C_OUT,), jnp.float32, -bound, bound)
    x = jax.random.normal(k1, (B, C_IN), jnp.float32)

    y = linear_pallas(x, weight, bias)
    jax.block_until_ready(y)
    y_ref = x @ weight.T + bias
    assert y.shape == (B, C_OUT)
    assert jnp.allclose(y, y_ref, atol=1e-5, rtol=1e-5)

    # --- Case 2: non-aligned shapes exercising padding-aware tiles, the K-tiled
    #     accumulator path, and the >=2-step parallel-axis split (v7x dual TC). ---
    B2, C_IN2, C_OUT2 = 160, 1100, 300
    k1, k2, k3, key = jax.random.split(key, 4)
    bound2 = 1.0 / (C_IN2 ** 0.5)
    weight2 = jax.random.uniform(k2, (C_OUT2, C_IN2), jnp.float32, -bound2, bound2)
    bias2 = jax.random.uniform(k3, (C_OUT2,), jnp.float32, -bound2, bound2)
    x2 = jax.random.normal(k1, (B2, C_IN2), jnp.float32)

    y2 = linear_pallas(x2, weight2, bias2)
    jax.block_until_ready(y2)
    y2_ref = x2 @ weight2.T + bias2
    assert y2.shape == (B2, C_OUT2)
    assert jnp.allclose(y2, y2_ref, atol=1e-4, rtol=1e-4)

    # --- Case 3: bf16 compute + f32 accumulation (MXU-native on v6e/v7x, ~2x HBM
    #     traffic reduction). Looser tolerance vs the f32 reference. ---
    y3 = linear_pallas(x2, weight2, bias2, compute_dtype=jnp.bfloat16)
    jax.block_until_ready(y3)
    assert y3.shape == (B2, C_OUT2)
    assert y3.dtype == y2_ref.dtype
    assert jnp.allclose(y3, y2_ref, atol=5e-2, rtol=5e-2)

    print("KERNEL_OK")
</pallas_src>

<mosaic_0001>
module attributes {stable_mosaic.version = 11 : i64} {
  func.func @_linear_kernel_single_k(%arg0: i32, %arg1: i32, %arg2: memref<8x128xf32, #tpu.memory_space<vmem>>, %arg3: memref<128x128xf32, #tpu.memory_space<vmem>>, %arg4: memref<1x128xf32, #tpu.memory_space<vmem>>, %arg5: memref<8x128xf32, #tpu.memory_space<vmem>>) attributes {dimension_semantics = [#tpu.dimension_semantics<parallel>, #tpu.dimension_semantics<parallel>], iteration_bounds = array<i64: 1, 1>, scalar_prefetch = 0 : i64, scratch_operands = 0 : i64, tpu.core_type = #tpu.core_type<tc>, window_params = [{transform_indices = @transform_0, window_bounds = array<i64: 8, 128>}, {transform_indices = @transform_1, window_bounds = array<i64: 128, 128>}, {transform_indices = @transform_2, window_bounds = array<i64: 1, 128>}, {transform_indices = @transform_3, window_bounds = array<i64: 8, 128>}]} {
    %c0 = arith.constant 0 : index
    %c0_0 = arith.constant 0 : index
    %0 = vector.load %arg2[%c0, %c0_0] : memref<8x128xf32, #tpu.memory_space<vmem>>, vector<8x128xf32>
    %c0_1 = arith.constant 0 : index
    %c0_2 = arith.constant 0 : index
    %1 = vector.load %arg3[%c0_1, %c0_2] : memref<128x128xf32, #tpu.memory_space<vmem>>, vector<128x128xf32>
    %cst = arith.constant dense<0.000000e+00> : vector<8x128xf32>
    %2 = tpu.matmul %0, %1, %cst {dimension_numbers = #tpu.dot_dimension_numbers<[1], [1], [0], [0], [0, 0, 1, 0], [], []>} : vector<8x128xf32>, vector<128x128xf32>, vector<8x128xf32> -> vector<8x128xf32>
    %c0_3 = arith.constant 0 : index
    %c0_4 = arith.constant 0 : index
    %3 = vector.load %arg4[%c0_3, %c0_4] : memref<1x128xf32, #tpu.memory_space<vmem>>, vector<1x128xf32>
    %4 = vector.broadcast %3 : vector<1x128xf32> to vector<8x128xf32>
    %5 = arith.addf %2, %4 : vector<8x128xf32>
    %c0_5 = arith.constant 0 : index
    %c0_6 = arith.constant 0 : index
    %6 = vector.load %arg5[%c0_5, %c0_6] : memref<8x128xf32, #tpu.memory_space<vmem>>, vector<8x128xf32>
    tpu.vector_store %arg5[%c0_5, %c0_6], %5 {strides = array<i32>} : memref<8x128xf32, #tpu.memory_space<vmem>>, vector<8x128xf32>,
    return
  }
  func.func @transform_0(%arg0: i32, %arg1: i32) -> (i32, i32) {
    %c0_i32 = arith.constant 0 : i32
    %c0_i32_0 = arith.constant 0 : i32
    return %arg0, %c0_i32 : i32, i32
  }
  func.func @transform_1(%arg0: i32, %arg1: i32) -> (i32, i32) {
    %c0_i32 = arith.constant 0 : i32
    %c0_i32_0 = arith.constant 0 : i32
    return %arg1, %c0_i32 : i32, i32
  }
  func.func @transform_2(%arg0: i32, %arg1: i32) -> (i32, i32) {
    %c0_i32 = arith.constant 0 : i32
    %c0_i32_0 = arith.constant 0 : i32
    return %c0_i32, %arg1 : i32, i32
  }
  func.func @transform_3(%arg0: i32, %arg1: i32) -> (i32, i32) {
    %c0_i32 = arith.constant 0 : i32
    return %arg0, %arg1 : i32, i32
  }
}

</mosaic_0001>

<llo_original>
// kernel: tpu_custom_call.1
$region0: #{tpu_custom_call.1}
  #allocation0 [shape = 'u32[]', space=smem, size = 0x4, offset = 0x4, fixed_abs, tag = 'smem constant byte address 0x4 - core index']
  #allocation1 [shape = 'u32[144,128]{1,0:T(1,128)}', space=vmem, size = 0x12000, scoped, tag = 'internal scratch']
  %s0 = inlined_call_operand.hbm [shape: f32[8,128], index: 0, kind: input, shape index: {}]
  %s1 = inlined_call_operand.hbm [shape: f32[128,128], index: 1, kind: input, shape index: {}]
  %s2 = inlined_call_operand.vmem [shape: f32[1,128], index: 2, kind: input, shape index: {}]
  %s3 = inlined_call_operand.hbm [shape: f32[8,128], index: 3, kind: output, shape index: {}]
  %s4 = sld [smem:[#allocation0]]
  $region30: #{tpu_custom_call.1} parent=0
    _
  %s6 = ssub.s32 1, %s4
  %s7 = scalar_select 0, %s6, %s4
  $region1: #{tpu_custom_call.1} parent=0
    #allocation2 [shape = 'u8[4096]{0}', space=vmem, size = 0x1000, scoped, tag = 'input window, operand 0, single buffered']
    #allocation3 [shape = 's32[1]{0}', space=sflag, size = 0x4, scoped, tag = 'scoped memory for tpu_custom_call.1']
    #allocation4 [shape = 's32[1]{0}', space=sflag, size = 0x4, scoped, tag = 'scoped memory for tpu_custom_call.1']
    #allocation5 [shape = 'u8[65536]{0}', space=vmem, size = 0x10000, scoped, tag = 'input window, operand 1, single buffered']
    #allocation6 [shape = 's32[1]{0}', space=sflag, size = 0x4, scoped, tag = 'scoped memory for tpu_custom_call.1']
    #allocation7 [shape = 'u8[4096]{0}', space=vmem, size = 0x1000, scoped, tag = 'output window, operand 0, single buffered']
    %8 = vsyncpa [#allocation3], 0
    %9 = vsyncpa [#allocation6], 0
    %10 = vsyncpa [#allocation4], 0
    // Predicated region
    $region2: #{tpu_custom_call.1} parent=1 // pred_check
      _
    $region3: #{tpu_custom_call.1} parent=1 // pred_check_branch
      %12 = sbr.rel (0) target = $region5
    $region4: #{tpu_custom_call.1} parent=1 // pred_region
      %s14 = ssub.s32 128, 128
      %15 = vsyncadd [#allocation3], %s14
      %s17 = sshll.u32 [#allocation2], 4
      %s18 = int_to_ptr.vmem [resolvable:$true] %s17
      %20 = dma.hbm_to_vmem [thread:$0]  %s0, 128, %s18, [#allocation3]
    $region5: #{tpu_custom_call.1} parent=1 // pred_fallthru
      _
    // Predicated region
    $region6: #{tpu_custom_call.1} parent=1 // pred_check
      _
    $region7: #{tpu_custom_call.1} parent=1 // pred_check_branch
      %22 = sbr.rel (0) target = $region9
    $region8: #{tpu_custom_call.1} parent=1 // pred_region
      %s24 = ssub.s32 2048, 2048
      %25 = vsyncadd [#allocation6], %s24
      %s26 = sshll.u32 [#allocation5], 4
      %s27 = int_to_ptr.vmem [resolvable:$true] %s26
      %32 = dma.hbm_to_vmem [thread:$0]  %s1, 2048, %s27, [#allocation6], 128, 128, 8
    $region9: #{tpu_custom_call.1} parent=1 // pred_fallthru
      _
    // Predicated region
    $region10: #{tpu_custom_call.1} parent=1 // pred_check
      _
    $region11: #{tpu_custom_call.1} parent=1 // pred_check_branch
      %34 = sbr.rel (0) target = $region13
    $region12: #{tpu_custom_call.1} parent=1 // pred_region
      _
    $region13: #{tpu_custom_call.1} parent=1 // pred_fallthru
      _
    // Predicated region
    $region14: #{tpu_custom_call.1} parent=1 // pred_check
      _
    $region15: #{tpu_custom_call.1} parent=1 // pred_check_branch
      %36 = sbr.rel (0) target = $region17
    $region16: #{tpu_custom_call.1} parent=1 // pred_region
      %37 = dma.done [#allocation3], 128
    $region17: #{tpu_custom_call.1} parent=1 // pred_fallthru
      _
    // Predicated region
    $region18: #{tpu_custom_call.1} parent=1 // pred_check
      _
    $region19: #{tpu_custom_call.1} parent=1 // pred_check_branch
      %39 = sbr.rel (0) target = $region21
    $region20: #{tpu_custom_call.1} parent=1 // pred_region
      %40 = dma.done [#allocation6], 2048
    $region21: #{tpu_custom_call.1} parent=1 // pred_fallthru
      _
    %v41 = vld [vmem:[#allocation2] sm:$0xff]
    %v42 = vld [vmem:[#allocation5] sm:$0xff]
    %v43 = vld [vmem:[#allocation5 + $0x8] sm:$0xff]
    %v44 = vld [vmem:[#allocation5 + $0x10] sm:$0xff]
    %v45 = vld [vmem:[#allocation5 + $0x18] sm:$0xff]
    %v46 = vld [vmem:[#allocation5 + $0x20] sm:$0xff]
    %v47 = vld [vmem:[#allocation5 + $0x28] sm:$0xff]
    %v48 = vld [vmem:[#allocation5 + $0x30] sm:$0xff]
    %v49 = vld [vmem:[#allocation5 + $0x38] sm:$0xff]
    %v50 = vld [vmem:[#allocation5 + $0x40] sm:$0xff]
    %v51 = vld [vmem:[#allocation5 + $0x48] sm:$0xff]
    %v52 = vld [vmem:[#allocation5 + $0x50] sm:$0xff]
    %v53 = vld [vmem:[#allocation5 + $0x58] sm:$0xff]
    %v54 = vld [vmem:[#allocation5 + $0x60] sm:$0xff]
    %v55 = vld [vmem:[#allocation5 + $0x68] sm:$0xff]
    %v56 = vld [vmem:[#allocation5 + $0x70] sm:$0xff]
    %v57 = vld [vmem:[#allocation5 + $0x78] sm:$0xff]
    %v58 = vld [vmem:[%s2] sm:$0x1]
    %v60 = vlaneseq
    %v61 = vshrl.u32 %v60, 7
    %v62 = vsub.s32 0, %v61
    %v63 = vrot.slane %v58, %v62
    %65 = vmatprep.subr.mxu0 0.0
    %66 = vmatpush1.xpose.msra.mxu0 %v42
    %67 = vmatprep.subr.mxu0 0.0
    %68 = vmatpush1.xpose.msra.mxu0 %v43
    %69 = vmatprep.subr.mxu0 0.0
    %70 = vmatpush1.xpose.msra.mxu0 %v44
    %71 = vmatprep.subr.mxu0 0.0
    %72 = vmatpush1.xpose.msra.mxu0 %v45
    %73 = vmatprep.subr.mxu0 0.0
    %74 = vmatpush1.xpose.msra.mxu0 %v46
    %75 = vmatprep.subr.mxu0 0.0
    %76 = vmatpush1.xpose.msra.mxu0 %v47
    %77 = vmatprep.subr.mxu0 0.0
    %78 = vmatpush1.xpose.msra.mxu0 %v48
    %79 = vmatprep.subr.mxu0 0.0
    %80 = vmatpush1.xpose.msra.mxu0 %v49
    %81 = vmatprep.subr.mxu0 0.0
    %82 = vmatpush1.xpose.msra.mxu0 %v50
    %83 = vmatprep.subr.mxu0 0.0
    %84 = vmatpush1.xpose.msra.mxu0 %v51
    %85 = vmatprep.subr.mxu0 0.0
    %86 = vmatpush1.xpose.msra.mxu0 %v52
    %87 = vmatprep.subr.mxu0 0.0
    %88 = vmatpush1.xpose.msra.mxu0 %v53
    %89 = vmatprep.subr.mxu0 0.0
    %90 = vmatpush1.xpose.msra.mxu0 %v54
    %91 = vmatprep.subr.mxu0 0.0
    %92 = vmatpush1.xpose.msra.mxu0 %v55
    %93 = vmatprep.subr.mxu0 0.0
    %94 = vmatpush1.xpose.msra.mxu0 %v56
    %95 = vmatprep.subr.mxu0 0.0
    %96 = vmatpush1.xpose.msra.mxu0 %v57
    %97 = vmatprep.subr.mxu0 0.0
    %98 = vmatpush1.xpose.msra.mxu0 0.0
    %99 = vmatprep.subr.mxu0 0.0
    %100 = vmatpush1.xpose.msra.mxu0 0.0
    %101 = vmatprep.subr.mxu0 0.0
    %102 = vmatpush1.xpose.msra.mxu0 0.0
    %103 = vmatprep.subr.mxu0 0.0
    %104 = vmatpush1.xpose.msra.mxu0 0.0
    %105 = vmatprep.subr.mxu0 0.0
    %106 = vmatpush1.xpose.msra.mxu0 0.0
    %107 = vmatprep.subr.mxu0 0.0
    %108 = vmatpush1.xpose.msra.mxu0 0.0
    %109 = vmatprep.subr.mxu0 0.0
    %110 = vmatpush1.xpose.msra.mxu0 0.0
    %111 = vmatprep.subr.mxu0 0.0
    %112 = vmatpush1.xpose.msra.mxu0 0.0
    %113 = vmatprep.subr.mxu0 0.0
    %114 = vmatpush1.xpose.msra.mxu0 0.0
    %115 = vmatprep.subr.mxu0 0.0
    %116 = vmatpush1.xpose.msra.mxu0 0.0
    %117 = vmatprep.subr.mxu0 0.0
    %118 = vmatpush1.xpose.msra.mxu0 0.0
    %119 = vmatprep.subr.mxu0 0.0
    %120 = vmatpush1.xpose.msra.mxu0 0.0
    %121 = vmatprep.subr.mxu0 0.0
    %122 = vmatpush1.xpose.msra.mxu0 0.0
    %123 = vmatprep.subr.mxu0 0.0
    %124 = vmatpush1.xpose.msra.mxu0 0.0
    %125 = vmatprep.subr.mxu0 0.0
    %126 = vmatpush1.xpose.msra.mxu0 0.0
    %127 = vmatprep.subr.mxu0 0.0
    %128 = vmatpush1.xpose.msra.mxu0 0.0
    %129 = vmatprep.mubr.f32.mxu0 0.0
    %130 = vmatmul.mubr.f32.gmra.mrb[0].mxu0 %v41
    %v131 = vpop.f32.mrb[0].mxu0
    %v132 = vadd.f32 %v63, %v131
    %v133 = vpop.f32.mrb[0].mxu0
    %134 = vdwg.mxu0
    %135 = vst [vmem:[#allocation7] sm:$0xff] %v132
    // Predicated region
    $region22: #{tpu_custom_call.1} parent=1 // pred_check
      _
    $region23: #{tpu_custom_call.1} parent=1 // pred_check_branch
      %137 = sbr.rel (0) target = $region25
    $region24: #{tpu_custom_call.1} parent=1 // pred_region
      %s139 = ssub.s32 128, 128
      %140 = vsyncadd [#allocation4], %s139
      %s142 = sshll.u32 [#allocation7], 4
      %s143 = int_to_ptr.vmem [resolvable:$true] %s142
      %145 = dma.vmem_to_hbm [thread:$0]  %s143, 128, %s3, [#allocation4]
    $region25: #{tpu_custom_call.1} parent=1 // pred_fallthru
      _
    // Predicated region
    $region26: #{tpu_custom_call.1} parent=1 // pred_check
      _
    $region27: #{tpu_custom_call.1} parent=1 // pred_check_branch
      %147 = sbr.rel (0) target = $region29
    $region28: #{tpu_custom_call.1} parent=1 // pred_region
      %148 = dma.done [#allocation4], 128
    $region29: #{tpu_custom_call.1} parent=1 // pred_fallthru
      _
    %149 = vsyncpa [#allocation3], 1
    %150 = vsyncpa [#allocation6], 1
    %151 = vsyncpa [#allocation4], 1

</llo_original>
